<compile_context>
chip_gen: v5e
topology: v5e:2x2
jax: 0.10.0
libtpu: 0.0.40
codegen_flags: <defaults>
</compile_context>

<pallas_src>
import math
from functools import partial

import numpy as np
import jax
import jax.numpy as jnp
from jax.experimental import pallas as pl
from jax.experimental.pallas import tpu as pltpu


def _round_up(x, m):
    return ((x + m - 1) // m) * m


# --------------------------------------------------------------------------- #
# Kernel
# --------------------------------------------------------------------------- #
def _fusion_kernel(x_ref, gq_ref, ca_ref, cb_ref, cc_ref, cd_ref, mp_ref,
                   bo_ref, gamma_ref, beta_ref, w1t_ref, b1_ref, w2t_ref,
                   b2_ref, o_ref, y_scr, acc_scr,
                   *, variants, num_heads, eps, approx_recip, mm_dtype):
    V = variants
    H = num_heads
    j = pl.program_id(1)

    # ---- phase 1 (j == 0): attention + out_proj + LayerNorm -> y_scr ------ #
    @pl.when(j == 0)
    def _attention_and_norm():
        x = x_ref[...].astype(jnp.float32)                        # (bm, V)
        # Lane-dense query slab: xq[m, q*H + h] = x[m, q]  (tiny 0/1 matmul).
        xq = jnp.dot(x, gq_ref[...],
                     preferred_element_type=jnp.float32)          # (bm, V*H)
        xc = [x[:, k:k + 1] for k in range(V)]                    # (bm, 1) each

        # Per key-variant scores over all (q, h):  s_k = (A_k*x_k + B_k)*xq
        #                                               + (C_k*x_k + D_k)
        s = []
        for k in range(V):
            a = ca_ref[k:k + 1, :] * xc[k] + cb_ref[k:k + 1, :]
            b = cc_ref[k:k + 1, :] * xc[k] + cd_ref[k:k + 1, :]
            s.append(a * xq + b)                                  # (bm, V*H)

        # Softmax over k: pairwise max/add across V wide slabs (no XLU reduce).
        m = s[0]
        for k in range(1, V):
            m = jnp.maximum(m, s[k])
        e = [jnp.exp(sk - m) for sk in s]
        denom = e[0]
        for k in range(1, V):
            denom = denom + e[k]
        if approx_recip:
            inv = pl.reciprocal(denom, approx=True)               # EUP vrcp
        else:
            inv = 1.0 / denom
        p = [ek * inv for ek in e]

        # P = [p_k * x_k | p_k] over (k, q, h) columns.  Value projection,
        # head masking, mean-over-q/V and out_proj are folded into Mp.
        P = jnp.concatenate([p[k] * xc[k] for k in range(V)] + p, axis=-1)
        fused = (jnp.dot(P, mp_ref[...], preferred_element_type=jnp.float32)
                 + bo_ref[...])                                   # (bm, D)

        # LayerNorm over llm_dim (f32).
        mu = jnp.mean(fused, axis=-1, keepdims=True)
        var = jnp.mean(jnp.square(fused - mu), axis=-1, keepdims=True)
        y = ((fused - mu) * jax.lax.rsqrt(var + eps) * gamma_ref[...]
             + beta_ref[...])

        y_scr[...] = y.astype(y_scr.dtype)
        acc_scr[...] = jnp.zeros_like(acc_scr)

    # ---- phase 2 (every j): FC weights streamed over the j grid axis ------ #
    # h1 columns [j*tn, (j+1)*tn) and the matching rows of W2 accumulate into
    # the resident (bm, D) f32 accumulator.
    h1 = jnp.maximum(
        jnp.dot(y_scr[...], w1t_ref[...], preferred_element_type=jnp.float32)
        + b1_ref[...], 0.0)
    acc_scr[...] += jnp.dot(h1.astype(mm_dtype), w2t_ref[...],
                            preferred_element_type=jnp.float32)

    @pl.when(j == pl.num_programs(1) - 1)
    def _finalize():
        o_ref[...] = (acc_scr[...] + b2_ref[...]).astype(o_ref.dtype)


# --------------------------------------------------------------------------- #
# Host-side precompute (rank-1 folding of the variant embeddings)
# --------------------------------------------------------------------------- #
def _precompute(params, *, num_heads, matmul_dtype):
    W_emb = params["W_emb"].astype(jnp.float32)                   # (V, D)
    b_emb = params["b_emb"].astype(jnp.float32)                   # (V, D)
    V, D = W_emb.shape
    H = num_heads
    Dh = D // H
    scale = 1.0 / math.sqrt(Dh)

    with jax.default_matmul_precision("highest"):                 # tiny, keep exact
        qW = W_emb @ params["Wq"].T
        qb = b_emb @ params["Wq"].T + params["bq"][None, :]
        kW = W_emb @ params["Wk"].T
        kb = b_emb @ params["Wk"].T + params["bk"][None, :]
        vW = W_emb @ params["Wv"].T
        vb = b_emb @ params["Wv"].T + params["bv"][None, :]

        r = lambda a: a.reshape(V, H, Dh)
        A = jnp.einsum("qhd,khd->qkh", r(qW), r(kW)) * scale
        Bq = jnp.einsum("qhd,khd->qkh", r(qW), r(kb)) * scale
        Ck = jnp.einsum("qhd,khd->qkh", r(qb), r(kW)) * scale
        Dc = jnp.einsum("qhd,khd->qkh", r(qb), r(kb)) * scale

        # Fold value slope/bias, head masking, mean (1/V) and out_proj into Mp.
        Wo3 = params["Wo"].astype(jnp.float32).reshape(D, H, Dh)  # (out, h, d)
        Ma = jnp.einsum("khd,ohd->kho", r(vW), Wo3) / V           # (V, H, D)
        Mb = jnp.einsum("khd,ohd->kho", r(vb), Wo3) / V

    QH = V * H
    kslab = lambda c: c.transpose(1, 0, 2).reshape(V, QH).astype(jnp.float32)
    Gq = jnp.repeat(jnp.eye(V, dtype=jnp.float32), H, axis=1)     # (V, QH)
    Ma_full = jnp.broadcast_to(Ma[:, None], (V, V, H, D)).reshape(V * QH, D)
    Mb_full = jnp.broadcast_to(Mb[:, None], (V, V, H, D)).reshape(V * QH, D)
    Mp = jnp.concatenate([Ma_full, Mb_full], axis=0).astype(jnp.float32)

    row = lambda a: jnp.asarray(a).reshape(1, D).astype(jnp.float32)
    return dict(
        Gq=Gq, cA=kslab(A), cB=kslab(Bq), cC=kslab(Ck), cD=kslab(Dc), Mp=Mp,
        bo=row(params["bo"]), gamma=row(params["gamma"]), beta=row(params["beta"]),
        W1T=params["W1"].T.astype(matmul_dtype), b1=row(params["b1"]),
        W2T=params["W2"].T.astype(matmul_dtype), b2=row(params["b2"]),
    )


# --------------------------------------------------------------------------- #
# Sizing helpers (per-generation VMEM budget + footprint estimate)
# --------------------------------------------------------------------------- #
def _vmem_budget_bytes():
    try:
        kind = jax.devices()[0].device_kind.lower()
    except Exception:
        kind = ""
    if "v2" in kind or "v3" in kind:
        return 12 * 1024 * 1024
    if "v7" in kind:
        return 56 * 1024 * 1024            # v7x: 64 MiB physical per TensorCore
    return 100 * 1024 * 1024               # v4/v5e/v6e: 128 MiB physical


def _vmem_estimate(bm, tn, D, V, H, mm_bytes, out_bytes):
    QH = V * H
    P2 = 2 * V * QH
    small = 2 * (5 * V * QH * 4 + 6 * D * 4 + bm * V * 4)        # coefs/biases/x
    mp = 2 * P2 * D * 4                                          # Mp (f32)
    w = 2 * (D * tn + tn * D) * mm_bytes + 2 * tn * 4            # FC weight tiles
    out = 2 * bm * D * out_bytes
    scratch = bm * D * (mm_bytes + 4)                            # y_scr + acc_scr
    temps = 3 * bm * D * 4 + 4 * bm * P2 * 4                     # f32 temporaries
    return small + mp + w + out + scratch + temps


# --------------------------------------------------------------------------- #
# Public wrapper
# --------------------------------------------------------------------------- #
def variant_aware_fusion(x, params, *, num_heads=4, block_m=None, fc_block_n=512,
                         matmul_dtype=jnp.bfloat16, eps=1e-5):
    B, T, V = x.shape
    D = params["Wq"].shape[0]
    assert D % num_heads == 0
    assert params["W_emb"].shape == (V, D)
    H = num_heads
    M = B * T

    budget = _vmem_budget_bytes()
    if block_m is None:
        block_m = 512 if budget >= 96 * 1024 * 1024 else 256

    # FC weight-streaming tile: columns of W1 / rows of W2.  Falls back to the
    # full dimension when D cannot be split into 128-aligned tiles.
    tn = fc_block_n if (fc_block_n < D and D % fc_block_n == 0
                        and fc_block_n % 128 == 0) else D

    mm_bytes = jnp.dtype(matmul_dtype).itemsize
    out_bytes = jnp.dtype(x.dtype).itemsize
    bm = _round_up(max(8, min(block_m, _round_up(M, 8))), 8)
    for _ in range(8):
        if _vmem_estimate(bm, tn, D, V, H, mm_bytes, out_bytes) <= budget:
            break
        if bm > 64:
            bm = max(64, ((bm // 2) // 8) * 8)
        elif tn > 128 and (tn // 2) % 128 == 0 and D % (tn // 2) == 0:
            tn //= 2
        else:
            break
    est = _vmem_estimate(bm, tn, D, V, H, mm_bytes, out_bytes)
    vmem_limit = int(min(max(1.3 * est + (2 << 20), 32 * 1024 * 1024), budget))

    num_j = D // tn
    M_pad = _round_up(M, bm)
    grid = (M_pad // bm, num_j)

    x2 = x.reshape(M, V)
    if M_pad != M:
        x2 = jnp.pad(x2, ((0, M_pad - M), (0, 0)))

    w = _precompute(params, num_heads=num_heads, matmul_dtype=matmul_dtype)

    inv = lambda a: pl.BlockSpec(a.shape, lambda i, j: (0,) * a.ndim)
    in_specs = [
        pl.BlockSpec((bm, V), lambda i, j: (i, 0)),               # x tile
        inv(w["Gq"]), inv(w["cA"]), inv(w["cB"]), inv(w["cC"]), inv(w["cD"]),
        inv(w["Mp"]), inv(w["bo"]), inv(w["gamma"]), inv(w["beta"]),
        pl.BlockSpec((D, tn), lambda i, j: (0, j)),               # W1^T col tile
        pl.BlockSpec((1, tn), lambda i, j: (0, j)),               # b1 tile
        pl.BlockSpec((tn, D), lambda i, j: (j, 0)),               # W2^T row tile
        inv(w["b2"]),
    ]

    kernel = partial(
        _fusion_kernel, variants=V, num_heads=H, eps=eps,
        approx_recip=(jnp.dtype(matmul_dtype) != jnp.dtype(jnp.float32)),
        mm_dtype=matmul_dtype)

    out2 = pl.pallas_call(
        kernel,
        out_shape=jax.ShapeDtypeStruct((M_pad, D), x.dtype),
        grid=grid,
        in_specs=in_specs,
        out_specs=pl.BlockSpec((bm, D), lambda i, j: (i, 0)),
        scratch_shapes=[pltpu.VMEM((bm, D), matmul_dtype),        # LayerNorm output
                        pltpu.VMEM((bm, D), jnp.float32)],        # FC2 accumulator
        compiler_params=pltpu.CompilerParams(
            dimension_semantics=("parallel", "arbitrary"),
            vmem_limit_bytes=vmem_limit),
    )(x2, w["Gq"], w["cA"], w["cB"], w["cC"], w["cD"], w["Mp"],
      w["bo"], w["gamma"], w["beta"], w["W1T"], w["b1"], w["W2T"], w["b2"])

    return out2[:M].reshape(B, T, D)


# --------------------------------------------------------------------------- #
# Parameters + pure-JAX reference (mirrors the PyTorch module)
# --------------------------------------------------------------------------- #
def init_params(key, variants, llm_dim):
    ks = jax.random.split(key, 16)
    s = 0.1

    def n(k, shape):
        return jax.random.normal(k, shape, jnp.float32) * s

    return dict(
        W_emb=n(ks[0], (variants, llm_dim)),   # variant_embeddings[v].weight[:, 0]
        b_emb=n(ks[1], (variants, llm_dim)),
        Wq=n(ks[2], (llm_dim, llm_dim)), bq=n(ks[3], (llm_dim,)),
        Wk=n(ks[4], (llm_dim, llm_dim)), bk=n(ks[5], (llm_dim,)),
        Wv=n(ks[6], (llm_dim, llm_dim)), bv=n(ks[7], (llm_dim,)),
        Wo=n(ks[8], (llm_dim, llm_dim)), bo=n(ks[9], (llm_dim,)),
        gamma=jnp.ones((llm_dim,), jnp.float32) + n(ks[10], (llm_dim,)),
        beta=n(ks[11], (llm_dim,)),
        W1=n(ks[12], (llm_dim, llm_dim)), b1=n(ks[13], (llm_dim,)),
        W2=n(ks[14], (llm_dim, llm_dim)), b2=n(ks[15], (llm_dim,)),
    )


def ref_forward(x, p, num_heads=4, eps=1e-5):
    B, T, V = x.shape
    D = p["Wq"].shape[0]
    H = num_heads
    Dh = D // H
    emb = x[..., None] * p["W_emb"] + p["b_emb"]                  # (B, T, V, D)
    e = emb.reshape(B * T, V, D)
    q = e @ p["Wq"].T + p["bq"]
    k = e @ p["Wk"].T + p["bk"]
    v = e @ p["Wv"].T + p["bv"]
    qh = q.reshape(-1, V, H, Dh).transpose(0, 2, 1, 3)
    kh = k.reshape(-1, V, H, Dh).transpose(0, 2, 1, 3)
    vh = v.reshape(-1, V, H, Dh).transpose(0, 2, 1, 3)
    s = jnp.einsum("nhqd,nhkd->nhqk", qh, kh) / math.sqrt(Dh)
    a = jax.nn.softmax(s, axis=-1)
    o = jnp.einsum("nhqk,nhkd->nhqd", a, vh).transpose(0, 2, 1, 3).reshape(-1, V, D)
    o = o @ p["Wo"].T + p["bo"]
    fused = o.mean(axis=1).reshape(B, T, D)
    mu = fused.mean(-1, keepdims=True)
    var = ((fused - mu) ** 2).mean(-1, keepdims=True)
    y = (fused - mu) / jnp.sqrt(var + eps) * p["gamma"] + p["beta"]
    h1 = jax.nn.relu(y @ p["W1"].T + p["b1"])
    return h1 @ p["W2"].T + p["b2"]


if __name__ == "__main__":
    B, T, V, D, H = 2, 8, 4, 32, 4
    key = jax.random.PRNGKey(0)
    kx, kp = jax.random.split(key)
    x = jax.random.normal(kx, (B, T, V), jnp.float32)
    params = init_params(kp, V, D)

    # Fast path: bf16 FC weights, approx softmax reciprocal.
    out = variant_aware_fusion(x, params, num_heads=H)
    out = jax.block_until_ready(out)
    assert out.shape == (B, T, D)
    ref = ref_forward(x, params, num_heads=H)
    np.testing.assert_allclose(np.asarray(out), np.asarray(ref),
                               rtol=5e-2, atol=5e-2)

    # f32 path on a ragged token count: multi-step m grid + row padding.
    x3 = jax.random.normal(jax.random.PRNGKey(1), (2, 5, V), jnp.float32)
    out_f32 = variant_aware_fusion(x3, params, num_heads=H, block_m=8,
                                   matmul_dtype=jnp.float32)
    out_f32 = jax.block_until_ready(out_f32)
    np.testing.assert_allclose(np.asarray(out_f32),
                               np.asarray(ref_forward(x3, params, num_heads=H)),
                               rtol=1e-2, atol=1e-2)

    # FC weight-streaming path: D=256 with tn=128 -> 2 j-steps, V=3 variants.
    B2, T2, V2, D2 = 2, 8, 3, 256
    kx2, kp2 = jax.random.split(jax.random.PRNGKey(2))
    x4 = jax.random.normal(kx2, (B2, T2, V2), jnp.float32)
    params2 = init_params(kp2, V2, D2)
    out_s = variant_aware_fusion(x4, params2, num_heads=H, block_m=8,
                                 fc_block_n=128, matmul_dtype=jnp.float32)
    out_s = jax.block_until_ready(out_s)
    np.testing.assert_allclose(np.asarray(out_s),
                               np.asarray(ref_forward(x4, params2, num_heads=H)),
                               rtol=2e-2, atol=2e-2)

    print("KERNEL_OK")
</pallas_src>

<mosaic_0001>
module attributes {stable_mosaic.version = 11 : i64} {
  func.func @_fusion_kernel(%arg0: i32, %arg1: i32, %arg2: memref<16x4xf32, #tpu.memory_space<vmem>>, %arg3: memref<4x16xf32, #tpu.memory_space<vmem>>, %arg4: memref<4x16xf32, #tpu.memory_space<vmem>>, %arg5: memref<4x16xf32, #tpu.memory_space<vmem>>, %arg6: memref<4x16xf32, #tpu.memory_space<vmem>>, %arg7: memref<4x16xf32, #tpu.memory_space<vmem>>, %arg8: memref<128x32xf32, #tpu.memory_space<vmem>>, %arg9: memref<1x32xf32, #tpu.memory_space<vmem>>, %arg10: memref<1x32xf32, #tpu.memory_space<vmem>>, %arg11: memref<1x32xf32, #tpu.memory_space<vmem>>, %arg12: memref<32x32xbf16, #tpu.memory_space<vmem>>, %arg13: memref<1x32xf32, #tpu.memory_space<vmem>>, %arg14: memref<32x32xbf16, #tpu.memory_space<vmem>>, %arg15: memref<1x32xf32, #tpu.memory_space<vmem>>, %arg16: memref<16x32xf32, #tpu.memory_space<vmem>>, %arg17: memref<16x32xbf16, #tpu.memory_space<vmem>>, %arg18: memref<16x32xf32, #tpu.memory_space<vmem>>) attributes {dimension_semantics = [#tpu.dimension_semantics<parallel>, #tpu.dimension_semantics<arbitrary>], iteration_bounds = array<i64: 1, 1>, scalar_prefetch = 0 : i64, scratch_operands = 2 : i64, tpu.core_type = #tpu.core_type<tc>, window_params = [{transform_indices = @transform_0, window_bounds = array<i64: 16, 4>}, {pipeline_mode = #tpu.pipeline_mode<synchronous>, transform_indices = @transform_1, window_bounds = array<i64: 4, 16>}, {pipeline_mode = #tpu.pipeline_mode<synchronous>, transform_indices = @transform_2, window_bounds = array<i64: 4, 16>}, {pipeline_mode = #tpu.pipeline_mode<synchronous>, transform_indices = @transform_3, window_bounds = array<i64: 4, 16>}, {pipeline_mode = #tpu.pipeline_mode<synchronous>, transform_indices = @transform_4, window_bounds = array<i64: 4, 16>}, {pipeline_mode = #tpu.pipeline_mode<synchronous>, transform_indices = @transform_5, window_bounds = array<i64: 4, 16>}, {pipeline_mode = #tpu.pipeline_mode<synchronous>, transform_indices = @transform_6, window_bounds = array<i64: 128, 32>}, {pipeline_mode = #tpu.pipeline_mode<synchronous>, transform_indices = @transform_7, window_bounds = array<i64: 1, 32>}, {pipeline_mode = #tpu.pipeline_mode<synchronous>, transform_indices = @transform_8, window_bounds = array<i64: 1, 32>}, {pipeline_mode = #tpu.pipeline_mode<synchronous>, transform_indices = @transform_9, window_bounds = array<i64: 1, 32>}, {transform_indices = @transform_10, window_bounds = array<i64: 32, 32>}, {transform_indices = @transform_11, window_bounds = array<i64: 1, 32>}, {transform_indices = @transform_12, window_bounds = array<i64: 32, 32>}, {pipeline_mode = #tpu.pipeline_mode<synchronous>, transform_indices = @transform_13, window_bounds = array<i64: 1, 32>}, {transform_indices = @transform_14, window_bounds = array<i64: 16, 32>}]} {
    %c0_i32 = arith.constant 0 : i32
    %0 = arith.cmpi eq, %arg1, %c0_i32 : i32
    %1 = arith.extui %0 : i1 to i32
    %c0_i32_0 = arith.constant 0 : i32
    %2 = arith.cmpi ne, %1, %c0_i32_0 : i32
    scf.if %2 {
      %c0_16 = arith.constant 0 : index
      %c0_17 = arith.constant 0 : index
      %20 = vector.load %arg2[%c0_16, %c0_17] : memref<16x4xf32, #tpu.memory_space<vmem>>, vector<16x4xf32>
      %c0_18 = arith.constant 0 : index
      %c0_19 = arith.constant 0 : index
      %21 = vector.load %arg3[%c0_18, %c0_19] : memref<4x16xf32, #tpu.memory_space<vmem>>, vector<4x16xf32>
      %cst_20 = arith.constant dense<0.000000e+00> : vector<16x16xf32>
      %22 = tpu.matmul %20, %21, %cst_20 {dimension_numbers = #tpu.dot_dimension_numbers<[1], [0], [0], [1], [0, 0, 1, 1], [], []>} : vector<16x4xf32>, vector<4x16xf32>, vector<16x16xf32> -> vector<16x16xf32>
      %23 = vector.extract_strided_slice %20 {offsets = [0, 0], sizes = [16, 1], strides = [1, 1]} : vector<16x4xf32> to vector<16x1xf32>
      %24 = vector.extract_strided_slice %20 {offsets = [0, 1], sizes = [16, 1], strides = [1, 1]} : vector<16x4xf32> to vector<16x1xf32>
      %25 = vector.extract_strided_slice %20 {offsets = [0, 2], sizes = [16, 1], strides = [1, 1]} : vector<16x4xf32> to vector<16x1xf32>
      %26 = vector.extract_strided_slice %20 {offsets = [0, 3], sizes = [16, 1], strides = [1, 1]} : vector<16x4xf32> to vector<16x1xf32>
      %c0_21 = arith.constant 0 : index
      %c0_22 = arith.constant 0 : index
      %27 = vector.load %arg4[%c0_21, %c0_22] : memref<4x16xf32, #tpu.memory_space<vmem>>, vector<1x16xf32>
      %28 = vector.broadcast %27 : vector<1x16xf32> to vector<16x16xf32>
      %29 = vector.broadcast %23 : vector<16x1xf32> to vector<16x16xf32>
      %30 = arith.mulf %28, %29 : vector<16x16xf32>
      %c0_23 = arith.constant 0 : index
      %c0_24 = arith.constant 0 : index
      %31 = vector.load %arg5[%c0_23, %c0_24] : memref<4x16xf32, #tpu.memory_space<vmem>>, vector<1x16xf32>
      %32 = vector.broadcast %31 : vector<1x16xf32> to vector<16x16xf32>
      %33 = arith.addf %30, %32 : vector<16x16xf32>
      %c0_25 = arith.constant 0 : index
      %c0_26 = arith.constant 0 : index
      %34 = vector.load %arg6[%c0_25, %c0_26] : memref<4x16xf32, #tpu.memory_space<vmem>>, vector<1x16xf32>
      %35 = vector.broadcast %34 : vector<1x16xf32> to vector<16x16xf32>
      %36 = vector.broadcast %23 : vector<16x1xf32> to vector<16x16xf32>
      %37 = arith.mulf %35, %36 : vector<16x16xf32>
      %c0_27 = arith.constant 0 : index
      %c0_28 = arith.constant 0 : index
      %38 = vector.load %arg7[%c0_27, %c0_28] : memref<4x16xf32, #tpu.memory_space<vmem>>, vector<1x16xf32>
      %39 = vector.broadcast %38 : vector<1x16xf32> to vector<16x16xf32>
      %40 = arith.addf %37, %39 : vector<16x16xf32>
      %41 = arith.mulf %33, %22 : vector<16x16xf32>
      %42 = arith.addf %41, %40 : vector<16x16xf32>
      %c1 = arith.constant 1 : index
      %c0_29 = arith.constant 0 : index
      %43 = vector.load %arg4[%c1, %c0_29] : memref<4x16xf32, #tpu.memory_space<vmem>>, vector<1x16xf32>
      %44 = vector.broadcast %43 : vector<1x16xf32> to vector<16x16xf32>
      %45 = vector.broadcast %24 : vector<16x1xf32> to vector<16x16xf32>
      %46 = arith.mulf %44, %45 : vector<16x16xf32>
      %c1_30 = arith.constant 1 : index
      %c0_31 = arith.constant 0 : index
      %47 = vector.load %arg5[%c1_30, %c0_31] : memref<4x16xf32, #tpu.memory_space<vmem>>, vector<1x16xf32>
      %48 = vector.broadcast %47 : vector<1x16xf32> to vector<16x16xf32>
      %49 = arith.addf %46, %48 : vector<16x16xf32>
      %c1_32 = arith.constant 1 : index
      %c0_33 = arith.constant 0 : index
      %50 = vector.load %arg6[%c1_32, %c0_33] : memref<4x16xf32, #tpu.memory_space<vmem>>, vector<1x16xf32>
      %51 = vector.broadcast %50 : vector<1x16xf32> to vector<16x16xf32>
      %52 = vector.broadcast %24 : vector<16x1xf32> to vector<16x16xf32>
      %53 = arith.mulf %51, %52 : vector<16x16xf32>
      %c1_34 = arith.constant 1 : index
      %c0_35 = arith.constant 0 : index
      %54 = vector.load %arg7[%c1_34, %c0_35] : memref<4x16xf32, #tpu.memory_space<vmem>>, vector<1x16xf32>
      %55 = vector.broadcast %54 : vector<1x16xf32> to vector<16x16xf32>
      %56 = arith.addf %53, %55 : vector<16x16xf32>
      %57 = arith.mulf %49, %22 : vector<16x16xf32>
      %58 = arith.addf %57, %56 : vector<16x16xf32>
      %c2 = arith.constant 2 : index
      %c0_36 = arith.constant 0 : index
      %59 = vector.load %arg4[%c2, %c0_36] : memref<4x16xf32, #tpu.memory_space<vmem>>, vector<1x16xf32>
      %60 = vector.broadcast %59 : vector<1x16xf32> to vector<16x16xf32>
      %61 = vector.broadcast %25 : vector<16x1xf32> to vector<16x16xf32>
      %62 = arith.mulf %60, %61 : vector<16x16xf32>
      %c2_37 = arith.constant 2 : index
      %c0_38 = arith.constant 0 : index
      %63 = vector.load %arg5[%c2_37, %c0_38] : memref<4x16xf32, #tpu.memory_space<vmem>>, vector<1x16xf32>
      %64 = vector.broadcast %63 : vector<1x16xf32> to vector<16x16xf32>
      %65 = arith.addf %62, %64 : vector<16x16xf32>
      %c2_39 = arith.constant 2 : index
      %c0_40 = arith.constant 0 : index
      %66 = vector.load %arg6[%c2_39, %c0_40] : memref<4x16xf32, #tpu.memory_space<vmem>>, vector<1x16xf32>
      %67 = vector.broadcast %66 : vector<1x16xf32> to vector<16x16xf32>
      %68 = vector.broadcast %25 : vector<16x1xf32> to vector<16x16xf32>
      %69 = arith.mulf %67, %68 : vector<16x16xf32>
      %c2_41 = arith.constant 2 : index
      %c0_42 = arith.constant 0 : index
      %70 = vector.load %arg7[%c2_41, %c0_42] : memref<4x16xf32, #tpu.memory_space<vmem>>, vector<1x16xf32>
      %71 = vector.broadcast %70 : vector<1x16xf32> to vector<16x16xf32>
      %72 = arith.addf %69, %71 : vector<16x16xf32>
      %73 = arith.mulf %65, %22 : vector<16x16xf32>
      %74 = arith.addf %73, %72 : vector<16x16xf32>
      %c3 = arith.constant 3 : index
      %c0_43 = arith.constant 0 : index
      %75 = vector.load %arg4[%c3, %c0_43] : memref<4x16xf32, #tpu.memory_space<vmem>>, vector<1x16xf32>
      %76 = vector.broadcast %75 : vector<1x16xf32> to vector<16x16xf32>
      %77 = vector.broadcast %26 : vector<16x1xf32> to vector<16x16xf32>
      %78 = arith.mulf %76, %77 : vector<16x16xf32>
      %c3_44 = arith.constant 3 : index
      %c0_45 = arith.constant 0 : index
      %79 = vector.load %arg5[%c3_44, %c0_45] : memref<4x16xf32, #tpu.memory_space<vmem>>, vector<1x16xf32>
      %80 = vector.broadcast %79 : vector<1x16xf32> to vector<16x16xf32>
      %81 = arith.addf %78, %80 : vector<16x16xf32>
      %c3_46 = arith.constant 3 : index
      %c0_47 = arith.constant 0 : index
      %82 = vector.load %arg6[%c3_46, %c0_47] : memref<4x16xf32, #tpu.memory_space<vmem>>, vector<1x16xf32>
      %83 = vector.broadcast %82 : vector<1x16xf32> to vector<16x16xf32>
      %84 = vector.broadcast %26 : vector<16x1xf32> to vector<16x16xf32>
      %85 = arith.mulf %83, %84 : vector<16x16xf32>
      %c3_48 = arith.constant 3 : index
      %c0_49 = arith.constant 0 : index
      %86 = vector.load %arg7[%c3_48, %c0_49] : memref<4x16xf32, #tpu.memory_space<vmem>>, vector<1x16xf32>
      %87 = vector.broadcast %86 : vector<1x16xf32> to vector<16x16xf32>
      %88 = arith.addf %85, %87 : vector<16x16xf32>
      %89 = arith.mulf %81, %22 : vector<16x16xf32>
      %90 = arith.addf %89, %88 : vector<16x16xf32>
      %91 = arith.maximumf %42, %58 : vector<16x16xf32>
      %92 = arith.maximumf %91, %74 : vector<16x16xf32>
      %93 = arith.maximumf %92, %90 : vector<16x16xf32>
      %94 = arith.subf %42, %93 : vector<16x16xf32>
      %95 = math.exp %94 : vector<16x16xf32>
      %96 = arith.subf %58, %93 : vector<16x16xf32>
      %97 = math.exp %96 : vector<16x16xf32>
      %98 = arith.subf %74, %93 : vector<16x16xf32>
      %99 = math.exp %98 : vector<16x16xf32>
      %100 = arith.subf %90, %93 : vector<16x16xf32>
      %101 = math.exp %100 : vector<16x16xf32>
      %102 = arith.addf %95, %97 : vector<16x16xf32>
      %103 = arith.addf %102, %99 : vector<16x16xf32>
      %104 = arith.addf %103, %101 : vector<16x16xf32>
      %105 = tpu.reciprocal %104 {approx = true} : vector<16x16xf32> -> vector<16x16xf32>
      %106 = arith.mulf %95, %105 : vector<16x16xf32>
      %107 = arith.mulf %97, %105 : vector<16x16xf32>
      %108 = arith.mulf %99, %105 : vector<16x16xf32>
      %109 = arith.mulf %101, %105 : vector<16x16xf32>
      %110 = vector.broadcast %23 : vector<16x1xf32> to vector<16x16xf32>
      %111 = arith.mulf %106, %110 : vector<16x16xf32>
      %112 = vector.broadcast %24 : vector<16x1xf32> to vector<16x16xf32>
      %113 = arith.mulf %107, %112 : vector<16x16xf32>
      %114 = vector.broadcast %25 : vector<16x1xf32> to vector<16x16xf32>
      %115 = arith.mulf %108, %114 : vector<16x16xf32>
      %116 = vector.broadcast %26 : vector<16x1xf32> to vector<16x16xf32>
      %117 = arith.mulf %109, %116 : vector<16x16xf32>
      %118 = tpu.concatenate %111, %113, %115, %117, %106, %107, %108, %109 in 1 : vector<16x16xf32>, vector<16x16xf32>, vector<16x16xf32>, vector<16x16xf32>, vector<16x16xf32>, vector<16x16xf32>, vector<16x16xf32>, vector<16x16xf32> -> vector<16x128xf32>
      %c0_50 = arith.constant 0 : index
      %c0_51 = arith.constant 0 : index
      %119 = vector.load %arg8[%c0_50, %c0_51] : memref<128x32xf32, #tpu.memory_space<vmem>>, vector<128x32xf32>
      %cst_52 = arith.constant dense<0.000000e+00> : vector<16x32xf32>
      %120 = tpu.matmul %118, %119, %cst_52 {dimension_numbers = #tpu.dot_dimension_numbers<[1], [0], [0], [1], [0, 0, 1, 1], [], []>} : vector<16x128xf32>, vector<128x32xf32>, vector<16x32xf32> -> vector<16x32xf32>
      %c0_53 = arith.constant 0 : index
      %c0_54 = arith.constant 0 : index
      %121 = vector.load %arg9[%c0_53, %c0_54] : memref<1x32xf32, #tpu.memory_space<vmem>>, vector<1x32xf32>
      %122 = vector.broadcast %121 : vector<1x32xf32> to vector<16x32xf32>
      %123 = arith.addf %120, %122 : vector<16x32xf32>
      %cst_55 = arith.constant dense<0.000000e+00> : vector<16xf32>
      %124 = vector.multi_reduction <add>, %123, %cst_55 [1] : vector<16x32xf32> to vector<16xf32>
      %125 = vector.shape_cast %124 : vector<16xf32> to vector<16x1xf32>
      %cst_56 = arith.constant 3.200000e+01 : f32
      %126 = vector.broadcast %cst_56 : f32 to vector<16x1xf32>
      %127 = arith.divf %125, %126 : vector<16x1xf32>
      %128 = vector.broadcast %127 : vector<16x1xf32> to vector<16x32xf32>
      %129 = arith.subf %123, %128 : vector<16x32xf32>
      %130 = arith.mulf %129, %129 : vector<16x32xf32>
      %cst_57 = arith.constant dense<0.000000e+00> : vector<16xf32>
      %131 = vector.multi_reduction <add>, %130, %cst_57 [1] : vector<16x32xf32> to vector<16xf32>
      %132 = vector.shape_cast %131 : vector<16xf32> to vector<16x1xf32>
      %cst_58 = arith.constant 3.200000e+01 : f32
      %133 = vector.broadcast %cst_58 : f32 to vector<16x1xf32>
      %134 = arith.divf %132, %133 : vector<16x1xf32>
      %135 = vector.broadcast %127 : vector<16x1xf32> to vector<16x32xf32>
      %136 = arith.subf %123, %135 : vector<16x32xf32>
      %cst_59 = arith.constant 9.99999974E-6 : f32
      %137 = vector.broadcast %cst_59 : f32 to vector<16x1xf32>
      %138 = arith.addf %134, %137 : vector<16x1xf32>
      %139 = math.rsqrt %138 : vector<16x1xf32>
      %140 = vector.broadcast %139 : vector<16x1xf32> to vector<16x32xf32>
      %141 = arith.mulf %136, %140 : vector<16x32xf32>
      %c0_60 = arith.constant 0 : index
      %c0_61 = arith.constant 0 : index
      %142 = vector.load %arg10[%c0_60, %c0_61] : memref<1x32xf32, #tpu.memory_space<vmem>>, vector<1x32xf32>
      %143 = vector.broadcast %142 : vector<1x32xf32> to vector<16x32xf32>
      %144 = arith.mulf %141, %143 : vector<16x32xf32>
      %c0_62 = arith.constant 0 : index
      %c0_63 = arith.constant 0 : index
      %145 = vector.load %arg11[%c0_62, %c0_63] : memref<1x32xf32, #tpu.memory_space<vmem>>, vector<1x32xf32>
      %146 = vector.broadcast %145 : vector<1x32xf32> to vector<16x32xf32>
      %147 = arith.addf %144, %146 : vector<16x32xf32>
      %148 = arith.truncf %147 : vector<16x32xf32> to vector<16x32xbf16>
      %c0_64 = arith.constant 0 : index
      %c0_65 = arith.constant 0 : index
      %149 = vector.load %arg17[%c0_64, %c0_65] : memref<16x32xbf16, #tpu.memory_space<vmem>>, vector<16x32xbf16>
      tpu.vector_store %arg17[%c0_64, %c0_65], %148 {strides = array<i32>} : memref<16x32xbf16, #tpu.memory_space<vmem>>, vector<16x32xbf16>,
      %cst_66 = arith.constant 0.000000e+00 : f32
      %150 = vector.broadcast %cst_66 : f32 to vector<16x32xf32>
      %c0_67 = arith.constant 0 : index
      %c0_68 = arith.constant 0 : index
      %151 = vector.load %arg18[%c0_67, %c0_68] : memref<16x32xf32, #tpu.memory_space<vmem>>, vector<16x32xf32>
      tpu.vector_store %arg18[%c0_67, %c0_68], %150 {strides = array<i32>} : memref<16x32xf32, #tpu.memory_space<vmem>>, vector<16x32xf32>,
    } else {
    }
    %c0 = arith.constant 0 : index
    %c0_1 = arith.constant 0 : index
    %3 = vector.load %arg17[%c0, %c0_1] : memref<16x32xbf16, #tpu.memory_space<vmem>>, vector<16x32xbf16>
    %c0_2 = arith.constant 0 : index
    %c0_3 = arith.constant 0 : index
    %4 = vector.load %arg12[%c0_2, %c0_3] : memref<32x32xbf16, #tpu.memory_space<vmem>>, vector<32x32xbf16>
    %cst = arith.constant dense<0.000000e+00> : vector<16x32xf32>
    %5 = tpu.matmul %3, %4, %cst {dimension_numbers = #tpu.dot_dimension_numbers<[1], [0], [0], [1], [0, 0, 1, 1], [], []>} : vector<16x32xbf16>, vector<32x32xbf16>, vector<16x32xf32> -> vector<16x32xf32>
    %c0_4 = arith.constant 0 : index
    %c0_5 = arith.constant 0 : index
    %6 = vector.load %arg13[%c0_4, %c0_5] : memref<1x32xf32, #tpu.memory_space<vmem>>, vector<1x32xf32>
    %7 = vector.broadcast %6 : vector<1x32xf32> to vector<16x32xf32>
    %8 = arith.addf %5, %7 : vector<16x32xf32>
    %cst_6 = arith.constant 0.000000e+00 : f32
    %9 = vector.broadcast %cst_6 : f32 to vector<16x32xf32>
    %10 = arith.maximumf %8, %9 : vector<16x32xf32>
    %c0_7 = arith.constant 0 : index
    %c0_8 = arith.constant 0 : index
    %11 = vector.load %arg18[%c0_7, %c0_8] : memref<16x32xf32, #tpu.memory_space<vmem>>, vector<16x32xf32>
    %12 = arith.truncf %10 : vector<16x32xf32> to vector<16x32xbf16>
    %c0_9 = arith.constant 0 : index
    %c0_10 = arith.constant 0 : index
    %13 = vector.load %arg14[%c0_9, %c0_10] : memref<32x32xbf16, #tpu.memory_space<vmem>>, vector<32x32xbf16>
    %cst_11 = arith.constant dense<0.000000e+00> : vector<16x32xf32>
    %14 = tpu.matmul %12, %13, %cst_11 {dimension_numbers = #tpu.dot_dimension_numbers<[1], [0], [0], [1], [0, 0, 1, 1], [], []>} : vector<16x32xbf16>, vector<32x32xbf16>, vector<16x32xf32> -> vector<16x32xf32>
    %15 = arith.addf %11, %14 : vector<16x32xf32>
    %c0_12 = arith.constant 0 : index
    %c0_13 = arith.constant 0 : index
    %16 = vector.load %arg18[%c0_12, %c0_13] : memref<16x32xf32, #tpu.memory_space<vmem>>, vector<16x32xf32>
    tpu.vector_store %arg18[%c0_12, %c0_13], %15 {strides = array<i32>} : memref<16x32xf32, #tpu.memory_space<vmem>>, vector<16x32xf32>,
    %c0_i32_14 = arith.constant 0 : i32
    %17 = arith.cmpi eq, %arg1, %c0_i32_14 : i32
    %18 = arith.extui %17 : i1 to i32
    %c0_i32_15 = arith.constant 0 : i32
    %19 = arith.cmpi ne, %18, %c0_i32_15 : i32
    scf.if %19 {
      %c0_16 = arith.constant 0 : index
      %c0_17 = arith.constant 0 : index
      %20 = vector.load %arg18[%c0_16, %c0_17] : memref<16x32xf32, #tpu.memory_space<vmem>>, vector<16x32xf32>
      %c0_18 = arith.constant 0 : index
      %c0_19 = arith.constant 0 : index
      %21 = vector.load %arg15[%c0_18, %c0_19] : memref<1x32xf32, #tpu.memory_space<vmem>>, vector<1x32xf32>
      %22 = vector.broadcast %21 : vector<1x32xf32> to vector<16x32xf32>
      %23 = arith.addf %20, %22 : vector<16x32xf32>
      %c0_20 = arith.constant 0 : index
      %c0_21 = arith.constant 0 : index
      %24 = vector.load %arg16[%c0_20, %c0_21] : memref<16x32xf32, #tpu.memory_space<vmem>>, vector<16x32xf32>
      tpu.vector_store %arg16[%c0_20, %c0_21], %23 {strides = array<i32>} : memref<16x32xf32, #tpu.memory_space<vmem>>, vector<16x32xf32>,
    } else {
    }
    return
  }
  func.func @transform_0(%arg0: i32, %arg1: i32) -> (i32, i32) {
    %c0_i32 = arith.constant 0 : i32
    %c0_i32_0 = arith.constant 0 : i32
    return %arg0, %c0_i32 : i32, i32
  }
  func.func @transform_1(%arg0: i32, %arg1: i32) -> (i32, i32) {
    %c0_i32 = arith.constant 0 : i32
    %c0_i32_0 = arith.constant 0 : i32
    %c0_i32_1 = arith.constant 0 : i32
    return %c0_i32, %c0_i32_0 : i32, i32
  }
  func.func @transform_2(%arg0: i32, %arg1: i32) -> (i32, i32) {
    %c0_i32 = arith.constant 0 : i32
    %c0_i32_0 = arith.constant 0 : i32
    %c0_i32_1 = arith.constant 0 : i32
    return %c0_i32, %c0_i32_0 : i32, i32
  }
  func.func @transform_3(%arg0: i32, %arg1: i32) -> (i32, i32) {
    %c0_i32 = arith.constant 0 : i32
    %c0_i32_0 = arith.constant 0 : i32
    %c0_i32_1 = arith.constant 0 : i32
    return %c0_i32, %c0_i32_0 : i32, i32
  }
  func.func @transform_4(%arg0: i32, %arg1: i32) -> (i32, i32) {
    %c0_i32 = arith.constant 0 : i32
    %c0_i32_0 = arith.constant 0 : i32
    %c0_i32_1 = arith.constant 0 : i32
    return %c0_i32, %c0_i32_0 : i32, i32
  }
  func.func @transform_5(%arg0: i32, %arg1: i32) -> (i32, i32) {
    %c0_i32 = arith.constant 0 : i32
    %c0_i32_0 = arith.constant 0 : i32
    %c0_i32_1 = arith.constant 0 : i32
    return %c0_i32, %c0_i32_0 : i32, i32
  }
  func.func @transform_6(%arg0: i32, %arg1: i32) -> (i32, i32) {
    %c0_i32 = arith.constant 0 : i32
    %c0_i32_0 = arith.constant 0 : i32
    %c0_i32_1 = arith.constant 0 : i32
    return %c0_i32, %c0_i32_0 : i32, i32
  }
  func.func @transform_7(%arg0: i32, %arg1: i32) -> (i32, i32) {
    %c0_i32 = arith.constant 0 : i32
    %c0_i32_0 = arith.constant 0 : i32
    %c0_i32_1 = arith.constant 0 : i32
    return %c0_i32, %c0_i32_0 : i32, i32
  }
  func.func @transform_8(%arg0: i32, %arg1: i32) -> (i32, i32) {
    %c0_i32 = arith.constant 0 : i32
    %c0_i32_0 = arith.constant 0 : i32
    %c0_i32_1 = arith.constant 0 : i32
    return %c0_i32, %c0_i32_0 : i32, i32
  }
  func.func @transform_9(%arg0: i32, %arg1: i32) -> (i32, i32) {
    %c0_i32 = arith.constant 0 : i32
    %c0_i32_0 = arith.constant 0 : i32
    %c0_i32_1 = arith.constant 0 : i32
    return %c0_i32, %c0_i32_0 : i32, i32
  }
  func.func @transform_10(%arg0: i32, %arg1: i32) -> (i32, i32) {
    %c0_i32 = arith.constant 0 : i32
    %c0_i32_0 = arith.constant 0 : i32
    return %c0_i32, %arg1 : i32, i32
  }
  func.func @transform_11(%arg0: i32, %arg1: i32) -> (i32, i32) {
    %c0_i32 = arith.constant 0 : i32
    %c0_i32_0 = arith.constant 0 : i32
    return %c0_i32, %arg1 : i32, i32
  }
  func.func @transform_12(%arg0: i32, %arg1: i32) -> (i32, i32) {
    %c0_i32 = arith.constant 0 : i32
    %c0_i32_0 = arith.constant 0 : i32
    return %arg1, %c0_i32 : i32, i32
  }
  func.func @transform_13(%arg0: i32, %arg1: i32) -> (i32, i32) {
    %c0_i32 = arith.constant 0 : i32
    %c0_i32_0 = arith.constant 0 : i32
    %c0_i32_1 = arith.constant 0 : i32
    return %c0_i32, %c0_i32_0 : i32, i32
  }
  func.func @transform_14(%arg0: i32, %arg1: i32) -> (i32, i32) {
    %c0_i32 = arith.constant 0 : i32
    %c0_i32_0 = arith.constant 0 : i32
    return %arg0, %c0_i32 : i32, i32
  }
}

</mosaic_0001>

<llo_original>
// kernel: tpu_custom_call.1
$region0: #{tpu_custom_call.1}
  #allocation0 [shape = 'u32[]', space=smem, size = 0x4, offset = 0x4, fixed_abs, tag = 'smem constant byte address 0x4 - core index']
  #allocation1 [shape = 'u32[72,128]{1,0:T(1,128)}', space=vmem, size = 0x9000, scoped, tag = 'internal scratch']
  #allocation2 [shape = 'bf16[16,32]{1,0:T(8,128)(2,1)}', space=vmem, size = 0x1000, scoped, tag = 'scratch operand']
  #allocation3 [shape = 'f32[16,32]{1,0:T(8,128)}', space=vmem, size = 0x2000, scoped, tag = 'scratch operand']
  %s0 = inlined_call_operand.vmem [shape: f32[16,4], index: 0, kind: input, shape index: {}]
  %s1 = inlined_call_operand.vmem [shape: f32[4,16], index: 1, kind: input, shape index: {}]
  %s2 = inlined_call_operand.vmem [shape: f32[4,16], index: 2, kind: input, shape index: {}]
  %s3 = inlined_call_operand.vmem [shape: f32[4,16], index: 3, kind: input, shape index: {}]
  %s4 = inlined_call_operand.vmem [shape: f32[4,16], index: 4, kind: input, shape index: {}]
  %s5 = inlined_call_operand.vmem [shape: f32[4,16], index: 5, kind: input, shape index: {}]
  %s6 = inlined_call_operand.vmem [shape: f32[128,32], index: 6, kind: input, shape index: {}]
  %s7 = inlined_call_operand.vmem [shape: f32[1,32], index: 7, kind: input, shape index: {}]
  %s8 = inlined_call_operand.vmem [shape: f32[1,32], index: 8, kind: input, shape index: {}]
  %s9 = inlined_call_operand.vmem [shape: f32[1,32], index: 9, kind: input, shape index: {}]
  %s10 = inlined_call_operand.vmem [shape: bf16[32,32], index: 10, kind: input, shape index: {}]
  %s11 = inlined_call_operand.vmem [shape: f32[1,32], index: 11, kind: input, shape index: {}]
  %s12 = inlined_call_operand.vmem [shape: bf16[32,32], index: 12, kind: input, shape index: {}]
  %s13 = inlined_call_operand.vmem [shape: f32[1,32], index: 13, kind: input, shape index: {}]
  %s14 = inlined_call_operand.hbm [shape: f32[16,32], index: 14, kind: output, shape index: {}]
  %s15 = sld [smem:[#allocation0]]
  $region74: #{tpu_custom_call.1} parent=0
    _
  %s17 = ssub.s32 1, %s15
  %s18 = scalar_select 0, %s17, %s15
  $region1: #{tpu_custom_call.1} parent=0
    #allocation4 [shape = 'u8[8192]{0}', space=vmem, size = 0x2000, scoped, tag = 'output window, operand 0, single buffered']
    #allocation5 [shape = 's32[1]{0}', space=sflag, size = 0x4, scoped, tag = 'scoped memory for tpu_custom_call.1']
    %19 = vsyncpa [#allocation5], 0
    // Predicated region
    $region2: #{tpu_custom_call.1} parent=1 // pred_check
      _
    $region3: #{tpu_custom_call.1} parent=1 // pred_check_branch
      %21 = sbr.rel (0) target = $region5
    $region4: #{tpu_custom_call.1} parent=1 // pred_region
      _
    $region5: #{tpu_custom_call.1} parent=1 // pred_fallthru
      _
    // Predicated region
    $region6: #{tpu_custom_call.1} parent=1 // pred_check
      _
    $region7: #{tpu_custom_call.1} parent=1 // pred_check_branch
      %23 = sbr.rel (0) target = $region9
    $region8: #{tpu_custom_call.1} parent=1 // pred_region
      _
    $region9: #{tpu_custom_call.1} parent=1 // pred_fallthru
      _
    // Predicated region
    $region10: #{tpu_custom_call.1} parent=1 // pred_check
      _
    $region11: #{tpu_custom_call.1} parent=1 // pred_check_branch
      %25 = sbr.rel (0) target = $region13
    $region12: #{tpu_custom_call.1} parent=1 // pred_region
      _
    $region13: #{tpu_custom_call.1} parent=1 // pred_fallthru
      _
    // Predicated region
    $region14: #{tpu_custom_call.1} parent=1 // pred_check
      _
    $region15: #{tpu_custom_call.1} parent=1 // pred_check_branch
      %27 = sbr.rel (0) target = $region17
    $region16: #{tpu_custom_call.1} parent=1 // pred_region
      _
    $region17: #{tpu_custom_call.1} parent=1 // pred_fallthru
      _
    // Predicated region
    $region18: #{tpu_custom_call.1} parent=1 // pred_check
      _
    $region19: #{tpu_custom_call.1} parent=1 // pred_check_branch
      %29 = sbr.rel (0) target = $region21
    $region20: #{tpu_custom_call.1} parent=1 // pred_region
      _
    $region21: #{tpu_custom_call.1} parent=1 // pred_fallthru
      _
    // Predicated region
    $region22: #{tpu_custom_call.1} parent=1 // pred_check
      _
    $region23: #{tpu_custom_call.1} parent=1 // pred_check_branch
      %31 = sbr.rel (0) target = $region25
    $region24: #{tpu_custom_call.1} parent=1 // pred_region
      _
    $region25: #{tpu_custom_call.1} parent=1 // pred_fallthru
      _
    // Predicated region
    $region26: #{tpu_custom_call.1} parent=1 // pred_check
      _
    $region27: #{tpu_custom_call.1} parent=1 // pred_check_branch
      %33 = sbr.rel (0) target = $region29
    $region28: #{tpu_custom_call.1} parent=1 // pred_region
      _
    $region29: #{tpu_custom_call.1} parent=1 // pred_fallthru
      _
    // Predicated region
    $region30: #{tpu_custom_call.1} parent=1 // pred_check
      _
    $region31: #{tpu_custom_call.1} parent=1 // pred_check_branch
      %35 = sbr.rel (0) target = $region33
    $region32: #{tpu_custom_call.1} parent=1 // pred_region
      _
    $region33: #{tpu_custom_call.1} parent=1 // pred_fallthru
      _
    // Predicated region
    $region34: #{tpu_custom_call.1} parent=1 // pred_check
      _
    $region35: #{tpu_custom_call.1} parent=1 // pred_check_branch
      %37 = sbr.rel (0) target = $region37
    $region36: #{tpu_custom_call.1} parent=1 // pred_region
      _
    $region37: #{tpu_custom_call.1} parent=1 // pred_fallthru
      _
    // Predicated region
    $region38: #{tpu_custom_call.1} parent=1 // pred_check
      _
    $region39: #{tpu_custom_call.1} parent=1 // pred_check_branch
      %39 = sbr.rel (0) target = $region41
    $region40: #{tpu_custom_call.1} parent=1 // pred_region
      _
    $region41: #{tpu_custom_call.1} parent=1 // pred_fallthru
      _
    // Predicated region
    $region42: #{tpu_custom_call.1} parent=1 // pred_check
      _
    $region43: #{tpu_custom_call.1} parent=1 // pred_check_branch
      %41 = sbr.rel (0) target = $region45
    $region44: #{tpu_custom_call.1} parent=1 // pred_region
      _
    $region45: #{tpu_custom_call.1} parent=1 // pred_fallthru
      _
    // Predicated region
    $region46: #{tpu_custom_call.1} parent=1 // pred_check
      _
    $region47: #{tpu_custom_call.1} parent=1 // pred_check_branch
      %43 = sbr.rel (0) target = $region49
    $region48: #{tpu_custom_call.1} parent=1 // pred_region
      _
    $region49: #{tpu_custom_call.1} parent=1 // pred_fallthru
      _
    // Predicated region
    $region50: #{tpu_custom_call.1} parent=1 // pred_check
      _
    $region51: #{tpu_custom_call.1} parent=1 // pred_check_branch
      %45 = sbr.rel (0) target = $region53
    $region52: #{tpu_custom_call.1} parent=1 // pred_region
      _
    $region53: #{tpu_custom_call.1} parent=1 // pred_fallthru
      _
    // Predicated region
    $region54: #{tpu_custom_call.1} parent=1 // pred_check
      _
    $region55: #{tpu_custom_call.1} parent=1 // pred_check_branch
      %47 = sbr.rel (0) target = $region57
    $region56: #{tpu_custom_call.1} parent=1 // pred_region
      _
    $region57: #{tpu_custom_call.1} parent=1 // pred_fallthru
      _
    %p49 = scmp.eq.s32.totalorder 0, 0
    // Predicated region
    $region58: #{tpu_custom_call.1} parent=1 // pred_check
      %p50 = pneg %p49
    $region59: #{tpu_custom_call.1} parent=1 // pred_check_branch
      %52 = sbr.rel (%p50) target = $region61
    $region60: #{tpu_custom_call.1} parent=1 // pred_region
      %v53 = vld [vmem:[%s0] sm:$0xff]
      %v54 = vld [vmem:[%s0 + $0x8] sm:$0xff]
      %v55 = vld [vmem:[%s1] sm:$0xf]
      %vm56 = vcmask 31744
      %v58 = vsel %vm56, %v53, 0
      %v61 = vsel %vm56, %v54, 0
      %vm63 = vcmask 1043456
      %v65 = vsel %vm63, %v55, 0
      %67 = vmatpush.msra.mxu0 0.0
      %68 = vmatpush.msra.mxu0 0.0
      %69 = vmatpush.msra.mxu0 0.0
      %70 = vmatpush.msra.mxu0 0.0
      %71 = vmatpush.msra.mxu0 0.0
      %72 = vmatpush.msra.mxu0 0.0
      %73 = vmatpush.msra.mxu0 0.0
      %74 = vmatpush.msra.mxu0 0.0
      %75 = vmatpush.msra.mxu0 0.0
      %76 = vmatpush.msra.mxu0 0.0
      %77 = vmatpush.msra.mxu0 0.0
      %78 = vmatpush.msra.mxu0 0.0
      %79 = vmatpush.msra.mxu0 0.0
      %80 = vmatpush.msra.mxu0 0.0
      %81 = vmatpush.msra.mxu0 0.0
      %82 = vmatpush.msra.mxu0 %v65
      %83 = vmatmul.f32.gmra.mxu0 %v58
      %v84 = vpop.f32.mrf.mxu0
      %v85 = vadd.f32 0.0, %v84
      %86 = vmatmul.f32.gmra.mxu0 %v61
      %v87 = vpop.f32.mrf.mxu0
      %v88 = vadd.f32 0.0, %v87
      %89 = vdwg.mxu0
      %v90 = vld [vmem:[%s2] sm:$0x1]
      %v91 = vperm.slane %v90, 0
      %92 = vset.pattern.permute.xlu0 0
      %93 = vperm.xlu0 %92, %v53
      %v94 = vpop.permute.xlu0 %93
      %96 = vset.pattern.permute.xlu0 0
      %97 = vperm.xlu0 %96, %v54
      %v98 = vpop.permute.xlu0 %97
      %v100 = vmul.f32 %v91, %v94
      %v101 = vmul.f32 %v91, %v98
      %v102 = vld [vmem:[%s3] sm:$0x1]
      %v103 = vperm.slane %v102, 0
      %v104 = vadd.f32 %v100, %v103
      %v105 = vadd.f32 %v101, %v103
      %v106 = vld [vmem:[%s4] sm:$0x1]
      %v107 = vperm.slane %v106, 0
      %v108 = vmul.f32 %v107, %v94
      %v109 = vmul.f32 %v107, %v98
      %v110 = vld [vmem:[%s5] sm:$0x1]
      %v111 = vperm.slane %v110, 0
      %v112 = vadd.f32 %v108, %v111
      %v113 = vadd.f32 %v109, %v111
      %v114 = vmul.f32 %v104, %v85
      %v115 = vmul.f32 %v105, %v88
      %v116 = vadd.f32 %v114, %v112
      %v117 = vadd.f32 %v115, %v113
      %v118 = vld [vmem:[%s2 + $0x1] sm:$0x1]
      %v119 = vperm.slane %v118, 0
      %120 = vset.pattern.permute.xlu0 1
      %121 = vperm.xlu0 %120, %v53
      %v122 = vpop.permute.xlu0 %121
      %124 = vset.pattern.permute.xlu0 1
      %125 = vperm.xlu0 %124, %v54
      %v126 = vpop.permute.xlu0 %125
      %v128 = vmul.f32 %v119, %v122
      %v129 = vmul.f32 %v119, %v126
      %v130 = vld [vmem:[%s3 + $0x1] sm:$0x1]
      %v131 = vperm.slane %v130, 0
      %v132 = vadd.f32 %v128, %v131
      %v133 = vadd.f32 %v129, %v131
      %v134 = vld [vmem:[%s4 + $0x1] sm:$0x1]
      %v135 = vperm.slane %v134, 0
      %v136 = vmul.f32 %v135, %v122
      %v137 = vmul.f32 %v135, %v126
      %v138 = vld [vmem:[%s5 + $0x1] sm:$0x1]
      %v139 = vperm.slane %v138, 0
      %v140 = vadd.f32 %v136, %v139
      %v141 = vadd.f32 %v137, %v139
      %v142 = vmul.f32 %v132, %v85
      %v143 = vmul.f32 %v133, %v88
      %v144 = vadd.f32 %v142, %v140
      %v145 = vadd.f32 %v143, %v141
      %v146 = vld [vmem:[%s2 + $0x2] sm:$0x1]
      %v147 = vperm.slane %v146, 0
      %148 = vset.pattern.permute.xlu0 2
      %149 = vperm.xlu0 %148, %v53
      %v150 = vpop.permute.xlu0 %149
      %152 = vset.pattern.permute.xlu0 2
      %153 = vperm.xlu0 %152, %v54
      %v154 = vpop.permute.xlu0 %153
      %v156 = vmul.f32 %v147, %v150
      %v157 = vmul.f32 %v147, %v154
      %v158 = vld [vmem:[%s3 + $0x2] sm:$0x1]
      %v159 = vperm.slane %v158, 0
      %v160 = vadd.f32 %v156, %v159
      %v161 = vadd.f32 %v157, %v159
      %v162 = vld [vmem:[%s4 + $0x2] sm:$0x1]
      %v163 = vperm.slane %v162, 0
      %v164 = vmul.f32 %v163, %v150
      %v165 = vmul.f32 %v163, %v154
      %v166 = vld [vmem:[%s5 + $0x2] sm:$0x1]
      %v167 = vperm.slane %v166, 0
      %v168 = vadd.f32 %v164, %v167
      %v169 = vadd.f32 %v165, %v167
      %v170 = vmul.f32 %v160, %v85
      %v171 = vmul.f32 %v161, %v88
      %v172 = vadd.f32 %v170, %v168
      %v173 = vadd.f32 %v171, %v169
      %v174 = vld [vmem:[%s2 + $0x3] sm:$0x1]
      %v175 = vperm.slane %v174, 0
      %176 = vset.pattern.permute.xlu0 3
      %177 = vperm.xlu0 %176, %v53
      %v178 = vpop.permute.xlu0 %177
      %180 = vset.pattern.permute.xlu0 3
      %181 = vperm.xlu0 %180, %v54
      %v182 = vpop.permute.xlu0 %181
      %v184 = vmul.f32 %v175, %v178
      %v185 = vmul.f32 %v175, %v182
      %v186 = vld [vmem:[%s3 + $0x3] sm:$0x1]
      %v187 = vperm.slane %v186, 0
      %v188 = vadd.f32 %v184, %v187
      %v189 = vadd.f32 %v185, %v187
      %v190 = vld [vmem:[%s4 + $0x3] sm:$0x1]
      %v191 = vperm.slane %v190, 0
      %v192 = vmul.f32 %v191, %v178
      %v193 = vmul.f32 %v191, %v182
      %v194 = vld [vmem:[%s5 + $0x3] sm:$0x1]
      %v195 = vperm.slane %v194, 0
      %v196 = vadd.f32 %v192, %v195
      %v197 = vadd.f32 %v193, %v195
      %v198 = vmul.f32 %v188, %v85
      %v199 = vmul.f32 %v189, %v88
      %v200 = vadd.f32 %v198, %v196
      %v201 = vadd.f32 %v199, %v197
      %v202 = vmax.f32 %v116, %v144
      %v203 = vmax.f32 %v117, %v145
      %v204 = vmax.f32 %v202, %v172
      %v205 = vmax.f32 %v203, %v173
      %v206 = vmax.f32 %v204, %v200
      %v207 = vmax.f32 %v205, %v201
      %v208 = vsub.f32 %v116, %v206
      %v209 = vsub.f32 %v117, %v207
      %v210 = vmul.f32 %v208, 1.442695
      %v211 = vpow.pop %v210
      %v212 = vmul.f32 %v209, 1.442695
      %v213 = vpow.pop %v212
      %v214 = vsub.f32 %v144, %v206
      %v215 = vsub.f32 %v145, %v207
      %v216 = vmul.f32 %v214, 1.442695
      %v217 = vpow.pop %v216
      %v218 = vmul.f32 %v215, 1.442695
      %v219 = vpow.pop %v218
      %v220 = vsub.f32 %v172, %v206
      %v221 = vsub.f32 %v173, %v207
      %v222 = vmul.f32 %v220, 1.442695
      %v223 = vpow.pop %v222
      %v224 = vmul.f32 %v221, 1.442695
      %v225 = vpow.pop %v224
      %v226 = vsub.f32 %v200, %v206
      %v227 = vsub.f32 %v201, %v207
      %v228 = vmul.f32 %v226, 1.442695
      %v229 = vpow.pop %v228
      %v230 = vmul.f32 %v227, 1.442695
      %v231 = vpow.pop %v230
      %v232 = vadd.f32 %v211, %v217
      %v233 = vadd.f32 %v213, %v219
      %v234 = vadd.f32 %v232, %v223
      %v235 = vadd.f32 %v233, %v225
      %v236 = vadd.f32 %v234, %v229
      %v237 = vadd.f32 %v235, %v231
      %v238 = vrcp.pop %v236
      %v239 = vrcp.pop %v237
      %v240 = vmul.f32 %v211, %v238
      %v241 = vmul.f32 %v213, %v239
      %v242 = vmul.f32 %v217, %v238
      %v243 = vmul.f32 %v219, %v239
      %v244 = vmul.f32 %v223, %v238
      %v245 = vmul.f32 %v225, %v239
      %v246 = vmul.f32 %v229, %v238
      %v247 = vmul.f32 %v231, %v239
      %v248 = vmul.f32 %v240, %v94
      %v249 = vmul.f32 %v241, %v98
      %v250 = vmul.f32 %v242, %v122
      %v251 = vmul.f32 %v243, %v126
      %v252 = vmul.f32 %v244, %v150
      %v253 = vmul.f32 %v245, %v154
      %v254 = vmul.f32 %v246, %v178
      %v255 = vmul.f32 %v247, %v182
      %258 = vrot.lane.b32.xlu0 %v250, 16
      %v259 = vpop.permute.xlu0 %258
      %260 = vrot.lane.b32.xlu0 %v251, 16
      %v261 = vpop.permute.xlu0 %260
      %266 = vrot.lane.b32.xlu0 %v252, 32
      %v267 = vpop.permute.xlu0 %266
      %268 = vrot.lane.b32.xlu0 %v253, 32
      %v269 = vpop.permute.xlu0 %268
      %274 = vrot.lane.b32.xlu0 %v254, 48
      %v275 = vpop.permute.xlu0 %274
      %276 = vrot.lane.b32.xlu0 %v255, 48
      %v277 = vpop.permute.xlu0 %276
      %282 = vrot.lane.b32.xlu0 %v240, 64
      %v283 = vpop.permute.xlu0 %282
      %284 = vrot.lane.b32.xlu0 %v241, 64
      %v285 = vpop.permute.xlu0 %284
      %290 = vrot.lane.b32.xlu0 %v242, 80
      %v291 = vpop.permute.xlu0 %290
      %292 = vrot.lane.b32.xlu0 %v243, 80
      %v293 = vpop.permute.xlu0 %292
      %298 = vrot.lane.b32.xlu0 %v244, 96
      %v299 = vpop.permute.xlu0 %298
      %300 = vrot.lane.b32.xlu0 %v245, 96
      %v301 = vpop.permute.xlu0 %300
      %306 = vrot.lane.b32.xlu0 %v246, 112
      %v307 = vpop.permute.xlu0 %306
      %308 = vrot.lane.b32.xlu0 %v247, 112
      %v309 = vpop.permute.xlu0 %308
      %vm312 = vcmask 130048
      %v313 = vsel %vm312, %v248, %v259
      %v314 = vsel %vm312, %v249, %v261
      %vm315 = vcmask 261120
      %v316 = vsel %vm315, %v313, %v267
      %v317 = vsel %vm315, %v314, %v269
      %vm318 = vcmask 392192
      %v319 = vsel %vm318, %v316, %v275
      %v320 = vsel %vm318, %v317, %v277
      %vm321 = vcmask 523264
      %v322 = vsel %vm321, %v319, %v283
      %v323 = vsel %vm321, %v320, %v285
      %vm324 = vcmask 654336
      %v325 = vsel %vm324, %v322, %v291
      %v326 = vsel %vm324, %v323, %v293
      %vm327 = vcmask 785408
      %v328 = vsel %vm327, %v325, %v299
      %v329 = vsel %vm327, %v326, %v301
      %vm330 = vcmask 916480
      %v331 = vsel %vm330, %v328, %v307
      %v332 = vsel %vm330, %v329, %v309
      %v333 = vld [vmem:[%s6] sm:$0xff]
      %v334 = vld [vmem:[%s6 + $0x8] sm:$0xff]
      %v335 = vld [vmem:[%s6 + $0x10] sm:$0xff]
      %v336 = vld [vmem:[%s6 + $0x18] sm:$0xff]
      %v337 = vld [vmem:[%s6 + $0x20] sm:$0xff]
      %v338 = vld [vmem:[%s6 + $0x28] sm:$0xff]
      %v339 = vld [vmem:[%s6 + $0x30] sm:$0xff]
      %v340 = vld [vmem:[%s6 + $0x38] sm:$0xff]
      %v341 = vld [vmem:[%s6 + $0x40] sm:$0xff]
      %v342 = vld [vmem:[%s6 + $0x48] sm:$0xff]
      %v343 = vld [vmem:[%s6 + $0x50] sm:$0xff]
      %v344 = vld [vmem:[%s6 + $0x58] sm:$0xff]
      %v345 = vld [vmem:[%s6 + $0x60] sm:$0xff]
      %v346 = vld [vmem:[%s6 + $0x68] sm:$0xff]
      %v347 = vld [vmem:[%s6 + $0x70] sm:$0xff]
      %v348 = vld [vmem:[%s6 + $0x78] sm:$0xff]
      %v349 = vld [vmem:[%s7] sm:$0x1]
      %v351 = vperm.slane %v349, 0
      %353 = vmatpush.msra.mxu0 %v348
      %354 = vmatpush.msra.mxu0 %v347
      %355 = vmatpush.msra.mxu0 %v346
      %356 = vmatpush.msra.mxu0 %v345
      %357 = vmatpush.msra.mxu0 %v344
      %358 = vmatpush.msra.mxu0 %v343
      %359 = vmatpush.msra.mxu0 %v342
      %360 = vmatpush.msra.mxu0 %v341
      %361 = vmatpush.msra.mxu0 %v340
      %362 = vmatpush.msra.mxu0 %v339
      %363 = vmatpush.msra.mxu0 %v338
      %364 = vmatpush.msra.mxu0 %v337
      %365 = vmatpush.msra.mxu0 %v336
      %366 = vmatpush.msra.mxu0 %v335
      %367 = vmatpush.msra.mxu0 %v334
      %368 = vmatpush.msra.mxu0 %v333
      %369 = vmatmul.f32.gmra.mxu0 %v331
      %v370 = vpop.f32.mrf.mxu0
      %v371 = vadd.f32 %v351, %v370
      %372 = vmatmul.f32.gmra.mxu0 %v332
      %v373 = vpop.f32.mrf.mxu0
      %v374 = vadd.f32 %v351, %v373
      %375 = vdwg.mxu0
      %v376 = vsel %vm315, %v371, 0.0
      %377 = vadd.xlane.f32.xlu0 %v376
      %v378 = vpop.xlane.xlu0 %377
      %v379 = vsel %vm315, %v374, 0.0
      %380 = vadd.xlane.f32.xlu0 %v379
      %v381 = vpop.xlane.xlu0 %380
      %v382 = vrcp.pop 32.0
      %v383 = vmul.f32 32.0, %v382
      %v384 = vsub.f32 1.0, %v383
      %v385 = vmul.f32 %v382, %v384
      %v386 = vadd.f32 %v382, %v385
      %vm387 = vweird.f32 %v382
      %v388 = vsel %vm387, %v382, %v386
      %v389 = vmul.f32 %v378, %v388
      %v390 = vmul.f32 %v381, %v388
      %v391 = vsub.f32 %v371, %v389
      %v392 = vsub.f32 %v374, %v390
      %v393 = vmul.f32 %v391, %v391
      %v394 = vmul.f32 %v392, %v392
      %v395 = vsel %vm315, %v393, 0.0
      %396 = vadd.xlane.f32.xlu0 %v395
      %v397 = vpop.xlane.xlu0 %396
      %v398 = vsel %vm315, %v394, 0.0
      %399 = vadd.xlane.f32.xlu0 %v398
      %v400 = vpop.xlane.xlu0 %399
      %v401 = vmul.f32 %v397, %v388
      %v402 = vmul.f32 %v400, %v388
      %v403 = vadd.f32 %v401, 1e-05
      %v404 = vadd.f32 %v402, 1e-05
      %v405 = vrsqrt.pop %v403
      %v406 = vmul.f32 %v405, %v403
      %v407 = vmul.f32 %v406, %v405
      %v408 = vmul.f32 0.5, %v407
      %v409 = vsub.f32 1.5, %v408
      %v410 = vmul.f32 %v405, %v409
      %vm411 = vweird.f32 %v403
      %vm412 = vweird.f32 %v405
      %vm413 = vmor %vm411, %vm412
      %v414 = vsel %vm413, %v405, %v410
      %v415 = vrsqrt.pop %v404
      %v416 = vmul.f32 %v415, %v404
      %v417 = vmul.f32 %v416, %v415
      %v418 = vmul.f32 0.5, %v417
      %v419 = vsub.f32 1.5, %v418
      %v420 = vmul.f32 %v415, %v419
      %vm421 = vweird.f32 %v404
      %vm422 = vweird.f32 %v415
      %vm423 = vmor %vm421, %vm422
      %v424 = vsel %vm423, %v415, %v420
      %v425 = vmul.f32 %v391, %v414
      %v426 = vmul.f32 %v392, %v424
      %v427 = vld [vmem:[%s8] sm:$0x1]
      %v429 = vperm.slane %v427, 0
      %v431 = vmul.f32 %v425, %v429
      %v432 = vmul.f32 %v426, %v429
      %v433 = vld [vmem:[%s9] sm:$0x1]
      %v435 = vperm.slane %v433, 0
      %v437 = vadd.f32 %v431, %v435
      %v438 = vadd.f32 %v432, %v435
      %v439 = vpack.c.bf16 %v437, %v437
      %v440 = vpack.c.bf16 %v438, %v438
      %vm441 = vcmask 257024
      %442 = vst.msk [vmem:[#allocation2] sm:$0xf] %vm441, %v439
      %443 = vst.msk [vmem:[#allocation2 + $0x4] sm:$0xf] %vm441, %v440
      %444 = vst.msk [vmem:[#allocation3] sm:$0xff] %vm315, 0.0
      %445 = vst.msk [vmem:[#allocation3 + $0x8] sm:$0xff] %vm315, 0.0
    $region61: #{tpu_custom_call.1} parent=1 // pred_fallthru
      _
    %v446 = vld [vmem:[#allocation2] sm:$0xf]
    %v447 = vld [vmem:[#allocation2 + $0x4] sm:$0xf]
    %v448 = vld [vmem:[%s10] sm:$0xf]
    %v449 = vld [vmem:[%s10 + $0x4] sm:$0xf]
    %v450 = vld [vmem:[%s10 + $0x8] sm:$0xf]
    %v451 = vld [vmem:[%s10 + $0xc] sm:$0xf]
    %v452 = vld [vmem:[%s11] sm:$0x1]
    %v454 = vperm.slane %v452, 0
    %v458 = vunpack.c.l.b16 %v446
    %v459 = vunpack.c.l.b16 %v447
    %v460 = vpack.c.b16 %v459, %v458
    %v465 = vunpack.c.l.b16 %v448
    %v466 = vunpack.c.l.b16 %v449
    %v467 = vunpack.c.l.b16 %v450
    %v468 = vunpack.c.l.b16 %v451
    %v469 = vpack.c.b16 %v466, %v465
    %v470 = vpack.c.b16 %v468, %v467
    %vm473 = vcmask 261120
    %v475 = vsel %vm473, %v460, 0
    %477 = vmatpush.bf16.msra.mxu0 0
    %478 = vmatpush.bf16.msra.mxu0 0
    %479 = vmatpush.bf16.msra.mxu0 0
    %480 = vmatpush.bf16.msra.mxu0 0
    %481 = vmatpush.bf16.msra.mxu0 0
    %482 = vmatpush.bf16.msra.mxu0 0
    %483 = vmatpush.bf16.msra.mxu0 %v470
    %484 = vmatpush.bf16.msra.mxu0 %v469
    %485 = vmatmul.bf16.gmra.mxu0 %v475
    %v486 = vpop.f32.mrf.mxu0
    %v487 = vadd.f32 %v454, %v486
    %v488 = vpop.f32.mrf.mxu0
    %v489 = vadd.f32 %v454, %v488
    %490 = vdwg.mxu0
    %v491 = vmax.f32 %v487, 0.0
    %v492 = vmax.f32 %v489, 0.0
    %v493 = vld [vmem:[#allocation3] sm:$0xff]
    %v494 = vld [vmem:[#allocation3 + $0x8] sm:$0xff]
    %v495 = vpack.c.bf16 %v492, %v491
    %v496 = vld [vmem:[%s12] sm:$0xf]
    %v497 = vld [vmem:[%s12 + $0x4] sm:$0xf]
    %v498 = vld [vmem:[%s12 + $0x8] sm:$0xf]
    %v499 = vld [vmem:[%s12 + $0xc] sm:$0xf]
    %v504 = vunpack.c.l.b16 %v496
    %v505 = vunpack.c.l.b16 %v497
    %v506 = vunpack.c.l.b16 %v498
    %v507 = vunpack.c.l.b16 %v499
    %v508 = vpack.c.b16 %v505, %v504
    %v509 = vpack.c.b16 %v507, %v506
    %v513 = vsel %vm473, %v495, 0
    %515 = vmatpush.bf16.msra.mxu0 0
    %516 = vmatpush.bf16.msra.mxu0 0
    %517 = vmatpush.bf16.msra.mxu0 0
    %518 = vmatpush.bf16.msra.mxu0 0
    %519 = vmatpush.bf16.msra.mxu0 0
    %520 = vmatpush.bf16.msra.mxu0 0
    %521 = vmatpush.bf16.msra.mxu0 %v509
    %522 = vmatpush.bf16.msra.mxu0 %v508
    %523 = vmatmul.bf16.gmra.mxu0 %v513
    %v524 = vpop.f32.mrf.mxu0
    %v525 = vadd.f32 0.0, %v524
    %v526 = vpop.f32.mrf.mxu0
    %v527 = vadd.f32 0.0, %v526
    %528 = vdwg.mxu0
    %v529 = vadd.f32 %v493, %v525
    %v530 = vadd.f32 %v494, %v527
    %531 = vst.msk [vmem:[#allocation3] sm:$0xff] %vm473, %v529
    %532 = vst.msk [vmem:[#allocation3 + $0x8] sm:$0xff] %vm473, %v530
    // Predicated region
    $region62: #{tpu_custom_call.1} parent=1 // pred_check
      %p533 = pneg %p49
    $region63: #{tpu_custom_call.1} parent=1 // pred_check_branch
      %535 = sbr.rel (%p533) target = $region65
    $region64: #{tpu_custom_call.1} parent=1 // pred_region
      %v536 = vld [vmem:[#allocation3] sm:$0xff]
      %v537 = vld [vmem:[#allocation3 + $0x8] sm:$0xff]
      %v538 = vld [vmem:[%s13] sm:$0x1]
      %v540 = vperm.slane %v538, 0
      %v542 = vadd.f32 %v536, %v540
      %v543 = vadd.f32 %v537, %v540
      %544 = vst.msk [vmem:[#allocation4] sm:$0xff] %vm473, %v542
      %545 = vst.msk [vmem:[#allocation4 + $0x8] sm:$0xff] %vm473, %v543
    $region65: #{tpu_custom_call.1} parent=1 // pred_fallthru
      _
    // Predicated region
    $region66: #{tpu_custom_call.1} parent=1 // pred_check
      _
    $region67: #{tpu_custom_call.1} parent=1 // pred_check_branch
      %547 = sbr.rel (0) target = $region69
    $region68: #{tpu_custom_call.1} parent=1 // pred_region
      %549 = vsyncadd [#allocation5], 0
      %s550 = sshll.u32 [#allocation4], 4
      %s551 = int_to_ptr.vmem [resolvable:$true] %s550
      %s552 = sshll.u32 %s14, 4
      %s553 = int_to_ptr.hbm [resolvable:$true] %s552
      %558 = dma.vmem_to_hbm [thread:$0]  %s551, 256, %s553, [#allocation5], 128, 128, 8
    $region69: #{tpu_custom_call.1} parent=1 // pred_fallthru
      _
    // Predicated region
    $region70: #{tpu_custom_call.1} parent=1 // pred_check
      _
    $region71: #{tpu_custom_call.1} parent=1 // pred_check_branch
      %560 = sbr.rel (0) target = $region73
    $region72: #{tpu_custom_call.1} parent=1 // pred_region
      %562 = dma.done [#allocation5], 256
    $region73: #{tpu_custom_call.1} parent=1 // pred_fallthru
      _
    %563 = vsyncpa [#allocation5], 1

</llo_original>
